<compile_context>
chip_gen: v5e
topology: v5e:2x2
jax: 0.10.0
libtpu: 0.0.40
codegen_flags: <defaults>
</compile_context>

<pallas_src>
import functools

import jax
import jax.numpy as jnp
from jax.experimental import pallas as pl
from jax.experimental.pallas import tpu as pltpu


def _cdiv(x, y):
    return -(-x // y)


def _round_up(x, m):
    return ((x + m - 1) // m) * m


def _graph_pool_kernel(atoms_ref, edges_ref, out_ref):
    # atoms_ref: (Bt, A, Fp) f32, feature axis lane-dense (Fp % 128 == 0)
    # edges_ref: (Bt, D, A)  i32, atom axis on lanes; -1 = "no neighbor"
    # out_ref  : (Bt, A, Fp) f32
    atoms = atoms_ref[...]
    edges = edges_ref[...]
    bt, a, _ = atoms.shape
    d_max = edges.shape[1]

    neg_inf = jnp.asarray(-jnp.inf, dtype=atoms.dtype)
    iota_src = jax.lax.broadcasted_iota(jnp.int32, (1, 1, a), 2)     # source j on lanes

    acc = atoms                                                      # include_self=True
    has_neighbor = jnp.zeros((bt, a, 1), dtype=jnp.bool_)

    # D is small (4-8): static unroll.  Per slot: VPU compares build a one-hot
    # row selector, one batched MXU contraction gathers the neighbor features,
    # and a running VPU max folds it in.  Data path is O(D*A*F); no dense
    # (A, A, F) intermediate and no XLU sublane reductions.
    for dslot in range(d_max):
        idx = edges[:, dslot, :][:, :, None]                         # (Bt, A, 1)
        slot_used = idx != -1                                        # (Bt, A, 1)

        # Exact gather: each one-hot row has at most one 1 (no accumulation).
        onehot = (idx == iota_src).astype(atoms.dtype)               # (Bt, A, A)
        gathered = jnp.einsum(
            "bij,bjf->bif", onehot, atoms,
            preferred_element_type=jnp.float32).astype(atoms.dtype)  # (Bt, A, Fp)

        # Unused slot (idx == -1) -> all-zero one-hot row -> gathered == 0;
        # mask it to -inf so it cannot raise the max.  acc is seeded with
        # `atoms`, so the final max stays finite (no -inf * 0 NaN hazard).
        gathered = jnp.where(slot_used, gathered, neg_inf)
        acc = jnp.maximum(acc, gathered)
        has_neighbor = has_neighbor | slot_used

    # Zero out atoms with no neighbors at all (degree == 0).
    out_ref[...] = acc * has_neighbor.astype(atoms.dtype)


def _tpu_config():
    """Per-generation VMEM budget / TensorCore count (conservative fallback)."""
    kind = ""
    try:
        kind = jax.devices()[0].device_kind.lower()
    except Exception:  # pragma: no cover - defensive
        pass
    if "v7" in kind:
        # 64 MiB VMEM per TC, 2 TCs per chip: keep blocks+temps well under it
        # and feed both cores.
        return dict(vmem_limit=48 << 20, tile_budget=36 << 20, tensorcores=2)
    if "v6" in kind or "trillium" in kind:
        # Single TC, 128 MiB physical VMEM: raise the scoped limit and go big.
        return dict(vmem_limit=96 << 20, tile_budget=80 << 20, tensorcores=1)
    if "v5 lite" in kind or "v5e" in kind or "v5lite" in kind:
        return dict(vmem_limit=96 << 20, tile_budget=80 << 20, tensorcores=1)
    # Unknown / older generation: stay inside the default scoped VMEM and
    # assume a 2-core chip so both cores get work if megacore sharding applies.
    return dict(vmem_limit=None, tile_budget=10 << 20, tensorcores=2)


def _pick_batch_tile(b, a, f_pad, d, *, tile_budget_bytes, tensorcores):
    """Samples per grid step, sized against declared blocks AND in-kernel
    temporaries, preferring an exact divisor of B near the target."""
    a_sub = _round_up(a, 8)       # sublane padding (f32 / i32)
    a_lane = _round_up(a, 128)    # lane padding
    d_sub = _round_up(d, 8)

    # Pipelined blocks (double-buffered by the Pallas runtime).
    blocks = 2 * (a_sub * f_pad * 4        # atoms block in
                  + a_sub * f_pad * 4      # out block
                  + d_sub * a_lane * 4)    # edges block in, (B, D, A) layout
    # In-kernel temporaries (single-buffered): one-hot selector, gathered +
    # acc accumulators, small mask/index relayouts.
    temps = (a_sub * a_lane * 4            # one-hot selector
             + 2 * a_sub * f_pad * 4       # gathered + acc
             + 2 * a_sub * 128 * 4)        # idx / has_neighbor relayouts
    per_sample = max(blocks + temps, 1)

    bt = max(1, tile_budget_bytes // per_sample)
    bt = min(bt, b)

    if tensorcores > 1 and b > 1:
        # Keep every TensorCore fed and the grid length a multiple of the core
        # count (an odd tail step would idle one core).
        bt = min(bt, _cdiv(b, tensorcores))
        for cand in range(bt, max(bt // 2, 1) - 1, -1):
            if _cdiv(b, cand) % tensorcores == 0:
                bt = cand
                break

    # Prefer an exact divisor of B close to the target (no ragged tail);
    # otherwise keep the target and let the cdiv grid handle the tail block.
    for cand in range(bt, max((3 * bt) // 4, 1) - 1, -1):
        if b % cand == 0:
            return cand
    return bt


@functools.partial(jax.jit, static_argnames=("batch_tile",))
def graph_pool(atoms, edges, *, batch_tile=None):
    """atoms: (B, A, F) float32, edges: (B, A, D) int32 -> (B, A, F) float32."""
    b, a, f = atoms.shape
    d = edges.shape[-1]

    # Lane-dense feature axis: pad F up to a multiple of 128 so every vreg,
    # DMA and store is full-width.  Padding columns are sliced off afterwards.
    f_pad = _round_up(f, 128)
    atoms_p = atoms if f_pad == f else jnp.pad(
        atoms, ((0, 0), (0, 0), (0, f_pad - f)))

    # Edges as (B, D, A): the tiny degree axis lands on sublanes (pads to 8)
    # instead of lanes (pads to 128), shrinking the edges block ~16x and making
    # each per-slot index read a cheap sublane slice.
    edges_t = jnp.transpose(edges, (0, 2, 1)).astype(jnp.int32)

    cfg = _tpu_config()
    bt = batch_tile if batch_tile is not None else _pick_batch_tile(
        b, a, f_pad, d,
        tile_budget_bytes=cfg["tile_budget"],
        tensorcores=cfg["tensorcores"])
    grid = (_cdiv(b, bt),)   # ragged tail handled by Pallas (no bt -> 1 cliff)

    flops = 2 * b * d * a * a * f_pad + 4 * b * d * a * f_pad
    bytes_accessed = 2 * b * a * f_pad * 4 + b * d * a * 4

    compiler_kwargs = dict(dimension_semantics=("parallel",))
    if cfg["vmem_limit"] is not None:
        compiler_kwargs["vmem_limit_bytes"] = int(cfg["vmem_limit"])

    out_p = pl.pallas_call(
        _graph_pool_kernel,
        out_shape=jax.ShapeDtypeStruct((b, a, f_pad), atoms.dtype),
        grid_spec=pltpu.PrefetchScalarGridSpec(
            num_scalar_prefetch=0,
            grid=grid,
            in_specs=[
                pl.BlockSpec((bt, a, f_pad), lambda i: (i, 0, 0)),
                pl.BlockSpec((bt, d, a), lambda i: (i, 0, 0)),
            ],
            out_specs=pl.BlockSpec((bt, a, f_pad), lambda i: (i, 0, 0)),
        ),
        compiler_params=pltpu.CompilerParams(**compiler_kwargs),
        cost_estimate=pl.CostEstimate(
            flops=flops, transcendentals=0, bytes_accessed=bytes_accessed),
    )(atoms_p, edges_t)

    return out_p if f_pad == f else out_p[:, :, :f]


def graph_pool_ref(atoms, edges):
    """Pure-JAX reference mirroring the PyTorch lookup_neighbors + max + mask."""
    b, _, f = atoms.shape
    neg_row = jnp.full((b, 1, f), -jnp.inf, dtype=atoms.dtype)
    masked_atoms = jnp.concatenate([neg_row, atoms], axis=1)            # (B, A+1, F)
    idx = edges + 1                                                     # (B, A, D)
    b_idx = jnp.arange(b)[:, None, None]
    nbr = masked_atoms[b_idx, idx]                                      # (B, A, D, F)
    nbr = jnp.concatenate([atoms[:, :, None, :], nbr], axis=2)          # include_self
    max_features = jnp.max(nbr, axis=2)                                 # (B, A, F)
    degree = jnp.sum((edges != -1).astype(jnp.int32), axis=-1, keepdims=True)
    mask = (degree != 0).astype(atoms.dtype)
    return max_features * mask


if __name__ == "__main__":
    key = jax.random.PRNGKey(0)
    k_atoms, k_edges = jax.random.split(key)

    B, A, D, F = 8, 16, 4, 32
    atoms = jax.random.normal(k_atoms, (B, A, F), dtype=jnp.float32)
    # edges in [-1, A): -1 means "no neighbor"
    edges = jax.random.randint(k_edges, (B, A, D), -1, A, dtype=jnp.int32)
    # make a couple of atoms fully degree-0 to exercise the mask path
    edges = edges.at[:, 0, :].set(-1)

    out = graph_pool(atoms, edges)
    out = jax.block_until_ready(out)

    ref = graph_pool_ref(atoms, edges)
    assert out.shape == (B, A, F)
    assert jnp.allclose(out, ref, atol=1e-6, rtol=1e-6), "mismatch vs reference"

    print("KERNEL_OK")
</pallas_src>

<mosaic_0001>
module attributes {stable_mosaic.version = 11 : i64} {
  func.func @_graph_pool_kernel(%arg0: i32, %arg1: memref<4x16x128xf32, #tpu.memory_space<vmem>>, %arg2: memref<4x4x16xi32, #tpu.memory_space<vmem>>, %arg3: memref<4x16x128xf32, #tpu.memory_space<vmem>>) attributes {dimension_semantics = [#tpu.dimension_semantics<parallel>], iteration_bounds = array<i64: 2>, scalar_prefetch = 0 : i64, scratch_operands = 0 : i64, tpu.core_type = #tpu.core_type<tc>, window_params = [{transform_indices = @transform_0, window_bounds = array<i64: 4, 16, 128>}, {transform_indices = @transform_1, window_bounds = array<i64: 4, 4, 16>}, {transform_indices = @transform_2, window_bounds = array<i64: 4, 16, 128>}]} {
    %c0 = arith.constant 0 : index
    %c0_0 = arith.constant 0 : index
    %c0_1 = arith.constant 0 : index
    %0 = vector.load %arg1[%c0, %c0_0, %c0_1] : memref<4x16x128xf32, #tpu.memory_space<vmem>>, vector<4x16x128xf32>
    %c0_2 = arith.constant 0 : index
    %c0_3 = arith.constant 0 : index
    %c0_4 = arith.constant 0 : index
    %1 = vector.load %arg2[%c0_2, %c0_3, %c0_4] : memref<4x4x16xi32, #tpu.memory_space<vmem>>, vector<4x4x16xi32>
    %2 = tpu.iota {dimensions = array<i32: 2>} : vector<1x1x16xi32>
    %false = arith.constant false
    %3 = vector.broadcast %false : i1 to vector<4x16x1xi1>
    %4 = vector.extract_strided_slice %1 {offsets = [0, 0, 0], sizes = [4, 1, 16], strides = [1, 1, 1]} : vector<4x4x16xi32> to vector<4x1x16xi32>
    %5 = vector.shape_cast %4 : vector<4x1x16xi32> to vector<4x16xi32>
    %6 = vector.shape_cast %5 : vector<4x16xi32> to vector<4x16x1xi32>
    %c-1_i32 = arith.constant -1 : i32
    %7 = vector.broadcast %c-1_i32 : i32 to vector<4x16x1xi32>
    %8 = arith.cmpi ne, %6, %7 : vector<4x16x1xi32>
    %9 = vector.broadcast %6 : vector<4x16x1xi32> to vector<4x16x16xi32>
    %10 = vector.broadcast %2 : vector<1x1x16xi32> to vector<4x16x16xi32>
    %11 = arith.cmpi eq, %9, %10 : vector<4x16x16xi32>
    %12 = arith.extui %11 : vector<4x16x16xi1> to vector<4x16x16xi32>
    %13 = arith.sitofp %12 : vector<4x16x16xi32> to vector<4x16x16xf32>
    "tpu.trace_start"() <{level = 10 : i32, message = "bij,bjf->bif"}> : () -> ()
    %cst = arith.constant dense<0.000000e+00> : vector<4x16x128xf32>
    %14 = tpu.matmul %13, %0, %cst {dimension_numbers = #tpu.dot_dimension_numbers<[2], [1], [1], [2], [0, 0, 0, 1, 1, 2], [0], [0]>} : vector<4x16x16xf32>, vector<4x16x128xf32>, vector<4x16x128xf32> -> vector<4x16x128xf32>
    %cst_5 = arith.constant 0xFF800000 : f32
    "tpu.trace_stop"() : () -> ()
    %15 = vector.shape_cast %8 : vector<4x16x1xi1> to vector<4x16x1xi1>
    %16 = vector.broadcast %15 : vector<4x16x1xi1> to vector<4x16x128xi1>
    %17 = vector.broadcast %cst_5 : f32 to vector<4x16x128xf32>
    %18 = arith.select %16, %14, %17 : vector<4x16x128xi1>, vector<4x16x128xf32>
    %19 = arith.maximumf %0, %18 : vector<4x16x128xf32>
    %20 = arith.ori %3, %8 : vector<4x16x1xi1>
    %21 = vector.extract_strided_slice %1 {offsets = [0, 1, 0], sizes = [4, 1, 16], strides = [1, 1, 1]} : vector<4x4x16xi32> to vector<4x1x16xi32>
    %22 = vector.shape_cast %21 : vector<4x1x16xi32> to vector<4x16xi32>
    %23 = vector.shape_cast %22 : vector<4x16xi32> to vector<4x16x1xi32>
    %c-1_i32_6 = arith.constant -1 : i32
    %24 = vector.broadcast %c-1_i32_6 : i32 to vector<4x16x1xi32>
    %25 = arith.cmpi ne, %23, %24 : vector<4x16x1xi32>
    %26 = vector.broadcast %23 : vector<4x16x1xi32> to vector<4x16x16xi32>
    %27 = vector.broadcast %2 : vector<1x1x16xi32> to vector<4x16x16xi32>
    %28 = arith.cmpi eq, %26, %27 : vector<4x16x16xi32>
    %29 = arith.extui %28 : vector<4x16x16xi1> to vector<4x16x16xi32>
    %30 = arith.sitofp %29 : vector<4x16x16xi32> to vector<4x16x16xf32>
    "tpu.trace_start"() <{level = 10 : i32, message = "bij,bjf->bif"}> : () -> ()
    %cst_7 = arith.constant dense<0.000000e+00> : vector<4x16x128xf32>
    %31 = tpu.matmul %30, %0, %cst_7 {dimension_numbers = #tpu.dot_dimension_numbers<[2], [1], [1], [2], [0, 0, 0, 1, 1, 2], [0], [0]>} : vector<4x16x16xf32>, vector<4x16x128xf32>, vector<4x16x128xf32> -> vector<4x16x128xf32>
    %cst_8 = arith.constant 0xFF800000 : f32
    "tpu.trace_stop"() : () -> ()
    %32 = vector.shape_cast %25 : vector<4x16x1xi1> to vector<4x16x1xi1>
    %33 = vector.broadcast %32 : vector<4x16x1xi1> to vector<4x16x128xi1>
    %34 = vector.broadcast %cst_8 : f32 to vector<4x16x128xf32>
    %35 = arith.select %33, %31, %34 : vector<4x16x128xi1>, vector<4x16x128xf32>
    %36 = arith.maximumf %19, %35 : vector<4x16x128xf32>
    %37 = arith.ori %20, %25 : vector<4x16x1xi1>
    %38 = vector.extract_strided_slice %1 {offsets = [0, 2, 0], sizes = [4, 1, 16], strides = [1, 1, 1]} : vector<4x4x16xi32> to vector<4x1x16xi32>
    %39 = vector.shape_cast %38 : vector<4x1x16xi32> to vector<4x16xi32>
    %40 = vector.shape_cast %39 : vector<4x16xi32> to vector<4x16x1xi32>
    %c-1_i32_9 = arith.constant -1 : i32
    %41 = vector.broadcast %c-1_i32_9 : i32 to vector<4x16x1xi32>
    %42 = arith.cmpi ne, %40, %41 : vector<4x16x1xi32>
    %43 = vector.broadcast %40 : vector<4x16x1xi32> to vector<4x16x16xi32>
    %44 = vector.broadcast %2 : vector<1x1x16xi32> to vector<4x16x16xi32>
    %45 = arith.cmpi eq, %43, %44 : vector<4x16x16xi32>
    %46 = arith.extui %45 : vector<4x16x16xi1> to vector<4x16x16xi32>
    %47 = arith.sitofp %46 : vector<4x16x16xi32> to vector<4x16x16xf32>
    "tpu.trace_start"() <{level = 10 : i32, message = "bij,bjf->bif"}> : () -> ()
    %cst_10 = arith.constant dense<0.000000e+00> : vector<4x16x128xf32>
    %48 = tpu.matmul %47, %0, %cst_10 {dimension_numbers = #tpu.dot_dimension_numbers<[2], [1], [1], [2], [0, 0, 0, 1, 1, 2], [0], [0]>} : vector<4x16x16xf32>, vector<4x16x128xf32>, vector<4x16x128xf32> -> vector<4x16x128xf32>
    %cst_11 = arith.constant 0xFF800000 : f32
    "tpu.trace_stop"() : () -> ()
    %49 = vector.shape_cast %42 : vector<4x16x1xi1> to vector<4x16x1xi1>
    %50 = vector.broadcast %49 : vector<4x16x1xi1> to vector<4x16x128xi1>
    %51 = vector.broadcast %cst_11 : f32 to vector<4x16x128xf32>
    %52 = arith.select %50, %48, %51 : vector<4x16x128xi1>, vector<4x16x128xf32>
    %53 = arith.maximumf %36, %52 : vector<4x16x128xf32>
    %54 = arith.ori %37, %42 : vector<4x16x1xi1>
    %55 = vector.extract_strided_slice %1 {offsets = [0, 3, 0], sizes = [4, 1, 16], strides = [1, 1, 1]} : vector<4x4x16xi32> to vector<4x1x16xi32>
    %56 = vector.shape_cast %55 : vector<4x1x16xi32> to vector<4x16xi32>
    %57 = vector.shape_cast %56 : vector<4x16xi32> to vector<4x16x1xi32>
    %c-1_i32_12 = arith.constant -1 : i32
    %58 = vector.broadcast %c-1_i32_12 : i32 to vector<4x16x1xi32>
    %59 = arith.cmpi ne, %57, %58 : vector<4x16x1xi32>
    %60 = vector.broadcast %57 : vector<4x16x1xi32> to vector<4x16x16xi32>
    %61 = vector.broadcast %2 : vector<1x1x16xi32> to vector<4x16x16xi32>
    %62 = arith.cmpi eq, %60, %61 : vector<4x16x16xi32>
    %63 = arith.extui %62 : vector<4x16x16xi1> to vector<4x16x16xi32>
    %64 = arith.sitofp %63 : vector<4x16x16xi32> to vector<4x16x16xf32>
    "tpu.trace_start"() <{level = 10 : i32, message = "bij,bjf->bif"}> : () -> ()
    %cst_13 = arith.constant dense<0.000000e+00> : vector<4x16x128xf32>
    %65 = tpu.matmul %64, %0, %cst_13 {dimension_numbers = #tpu.dot_dimension_numbers<[2], [1], [1], [2], [0, 0, 0, 1, 1, 2], [0], [0]>} : vector<4x16x16xf32>, vector<4x16x128xf32>, vector<4x16x128xf32> -> vector<4x16x128xf32>
    %cst_14 = arith.constant 0xFF800000 : f32
    "tpu.trace_stop"() : () -> ()
    %66 = vector.shape_cast %59 : vector<4x16x1xi1> to vector<4x16x1xi1>
    %67 = vector.broadcast %66 : vector<4x16x1xi1> to vector<4x16x128xi1>
    %68 = vector.broadcast %cst_14 : f32 to vector<4x16x128xf32>
    %69 = arith.select %67, %65, %68 : vector<4x16x128xi1>, vector<4x16x128xf32>
    %70 = arith.maximumf %53, %69 : vector<4x16x128xf32>
    %71 = arith.ori %54, %59 : vector<4x16x1xi1>
    %72 = arith.extui %71 : vector<4x16x1xi1> to vector<4x16x1xi32>
    %73 = arith.sitofp %72 : vector<4x16x1xi32> to vector<4x16x1xf32>
    %74 = vector.broadcast %73 : vector<4x16x1xf32> to vector<4x16x128xf32>
    %75 = arith.mulf %70, %74 : vector<4x16x128xf32>
    %c0_15 = arith.constant 0 : index
    %c0_16 = arith.constant 0 : index
    %c0_17 = arith.constant 0 : index
    %76 = vector.load %arg3[%c0_15, %c0_16, %c0_17] : memref<4x16x128xf32, #tpu.memory_space<vmem>>, vector<4x16x128xf32>
    tpu.vector_store %arg3[%c0_15, %c0_16, %c0_17], %75 {strides = array<i32>} : memref<4x16x128xf32, #tpu.memory_space<vmem>>, vector<4x16x128xf32>,
    return
  }
  func.func @transform_0(%arg0: i32) -> (i32, i32, i32) {
    %c0_i32 = arith.constant 0 : i32
    %c0_i32_0 = arith.constant 0 : i32
    %c0_i32_1 = arith.constant 0 : i32
    return %arg0, %c0_i32, %c0_i32_0 : i32, i32, i32
  }
  func.func @transform_1(%arg0: i32) -> (i32, i32, i32) {
    %c0_i32 = arith.constant 0 : i32
    %c0_i32_0 = arith.constant 0 : i32
    %c0_i32_1 = arith.constant 0 : i32
    return %arg0, %c0_i32, %c0_i32_0 : i32, i32, i32
  }
  func.func @transform_2(%arg0: i32) -> (i32, i32, i32) {
    %c0_i32 = arith.constant 0 : i32
    %c0_i32_0 = arith.constant 0 : i32
    %c0_i32_1 = arith.constant 0 : i32
    return %arg0, %c0_i32, %c0_i32_0 : i32, i32, i32
  }
}

</mosaic_0001>

<llo_original>
// kernel: graph_pool.1
$region0: #{graph_pool.1}
  #allocation0 [shape = 'u32[]', space=smem, size = 0x4, offset = 0x4, fixed_abs, tag = 'smem constant byte address 0x4 - core index']
  #allocation1 [shape = 'u32[72,128]{1,0:T(1,128)}', space=vmem, size = 0x9000, scoped, tag = 'internal scratch']
  %s0 = inlined_call_operand.vmem [shape: f32[8,16,128], index: 0, kind: input, shape index: {}]
  %s1 = inlined_call_operand.vmem [shape: s32[8,4,16], index: 1, kind: input, shape index: {}]
  %s2 = inlined_call_operand.hbm [shape: f32[8,16,128], index: 2, kind: output, shape index: {}]
  %s3 = sld [smem:[#allocation0]]
  $region41: #{graph_pool.1} parent=0
    _
  %s5 = ssub.s32 1, %s3
  %s6 = scalar_select 0, %s5, %s3
  $region1: #{graph_pool.1} parent=0
    #allocation2 [shape = 'u8[65536]{0}', space=vmem, size = 0x10000, scoped, tag = 'output window, operand 0']
    #allocation3 [shape = 's32[2]{0}', space=sflag, size = 0x8, scoped, tag = 'scoped memory for graph_pool.1']
    %7 = vsyncpa [#allocation3], 0
    %s8 = scalar_lea.sflag [#allocation3], 1
    %9 = vsyncpa %s8, 0
    loop: start=0, step=1, limit=4
    $region2: #{graph_pool.1} parent=1 // loop_pre_header
      _
    $region3: #{graph_pool.1} parent=1 // loop_header
      %s11 = sphi 0, %s15
      %p12 = scmp.ge.s32.totalorder %s11, 4
      %s21 = sphi 0, %s23
      %s24 = sphi 0, %s21
      %s25 = sphi 0, %s24
      %s41 = sphi 0, %s25
      %s47 = sphi 0, %s49
      %s50 = sphi 0, %s47
      %s51 = sphi 0, %s50
      %s67 = sphi 0, %s51
      %s73 = sphi 0, %s75
      %s76 = sphi 0, %s73
      %s77 = sphi 0, %s76
      %s93 = sphi 0, %s77
    $region4: #{graph_pool.1} parent=1 // loop_header_branch
      %14 = sbr.rel (%p12) target = $region8
    $region5: #{graph_pool.1} parent=1 // loop_body
      %s16 = ssub.s32 %s11, 1
      %s17 = ssub.s32 %s11, 2
      %s18 = sadd.s32 %s11, 1
      %s19 = ssub.s32 %s11, %s18
      %p20 = scmp.eq.s32.totalorder %s19, 0
      %s22 = sadd.s32 %s21, 1
      %s23 = scalar_select %p20, %s21, %s22
      %p26 = pneg %p20
      %p27 = scmp.eq.s32.totalorder %s11, 1
      %p28 = por %p26, %p27
      %p29 = scmp.ne.s32.totalorder %s21, %s24
      %p30 = scmp.eq.s32.totalorder %s11, 0
      %p31 = por %p29, %p30
      %p32 = scmp.ne.s32.totalorder %s21, %s24
      %p33 = scmp.eq.s32.totalorder %s16, 1
      %p34 = por %p32, %p33
      %p35 = scmp.ne.s32.totalorder %s24, %s25
      %p36 = scmp.eq.s32.totalorder %s16, 0
      %p37 = por %p35, %p36
      %p38 = scmp.ne.s32.totalorder %s24, %s25
      %p39 = scmp.eq.s32.totalorder %s17, 1
      %p40 = por %p38, %p39
      %p42 = scmp.ne.s32.totalorder %s25, %s41
      %p43 = scmp.eq.s32.totalorder %s17, 0
      %p44 = por %p42, %p43
      %s45 = ssub.s32 %s11, %s18
      %p46 = scmp.eq.s32.totalorder %s45, 0
      %s48 = sadd.s32 %s47, 1
      %s49 = scalar_select %p46, %s47, %s48
      %p52 = pneg %p46
      %p53 = scmp.eq.s32.totalorder %s11, 1
      %p54 = por %p52, %p53
      %p55 = scmp.ne.s32.totalorder %s47, %s50
      %p56 = scmp.eq.s32.totalorder %s11, 0
      %p57 = por %p55, %p56
      %p58 = scmp.ne.s32.totalorder %s47, %s50
      %p59 = scmp.eq.s32.totalorder %s16, 1
      %p60 = por %p58, %p59
      %p61 = scmp.ne.s32.totalorder %s50, %s51
      %p62 = scmp.eq.s32.totalorder %s16, 0
      %p63 = por %p61, %p62
      %p64 = scmp.ne.s32.totalorder %s50, %s51
      %p65 = scmp.eq.s32.totalorder %s17, 1
      %p66 = por %p64, %p65
      %p68 = scmp.ne.s32.totalorder %s51, %s67
      %p69 = scmp.eq.s32.totalorder %s17, 0
      %p70 = por %p68, %p69
      %s71 = ssub.s32 %s11, %s18
      %p72 = scmp.eq.s32.totalorder %s71, 0
      %s74 = sadd.s32 %s73, 1
      %s75 = scalar_select %p72, %s73, %s74
      %p78 = pneg %p72
      %p79 = scmp.eq.s32.totalorder %s11, 1
      %p80 = por %p78, %p79
      %p81 = scmp.ne.s32.totalorder %s73, %s76
      %p82 = scmp.eq.s32.totalorder %s11, 0
      %p83 = por %p81, %p82
      %p84 = scmp.ne.s32.totalorder %s73, %s76
      %p85 = scmp.eq.s32.totalorder %s16, 1
      %p86 = por %p84, %p85
      %p87 = scmp.ne.s32.totalorder %s76, %s77
      %p88 = scmp.eq.s32.totalorder %s16, 0
      %p89 = por %p87, %p88
      %p90 = scmp.ne.s32.totalorder %s76, %s77
      %p91 = scmp.eq.s32.totalorder %s17, 1
      %p92 = por %p90, %p91
      %p94 = scmp.ne.s32.totalorder %s77, %s93
      %p95 = scmp.eq.s32.totalorder %s17, 0
      %p96 = por %p94, %p95
      %p97 = scmp.le.s32.totalorder 1, %s11
      %p98 = scmp.lt.s32.totalorder %s11, 3
      %p99 = pnand %p97, %p98
      %p100 = pneg %p99
      // Predicated region
      $region9: #{graph_pool.1} parent=5 // pred_check
        _
      $region10: #{graph_pool.1} parent=5 // pred_check_branch
        %102 = sbr.rel (%p99) target = $region12
      $region11: #{graph_pool.1} parent=5 // pred_region
        %s103 = ssub.s32 %s11, 1
      $region12: #{graph_pool.1} parent=5 // pred_fallthru
        _
      %p104 = scmp.lt.s32.totalorder %s11, 2
      // Predicated region
      $region13: #{graph_pool.1} parent=5 // pred_check
        %p105 = pneg %p104
      $region14: #{graph_pool.1} parent=5 // pred_check_branch
        %107 = sbr.rel (%p105) target = $region16
      $region15: #{graph_pool.1} parent=5 // pred_region
        // Predicated region
        $region17: #{graph_pool.1} parent=15 // pred_check
          %p108 = pneg %p31
        $region18: #{graph_pool.1} parent=15 // pred_check_branch
          %110 = sbr.rel (%p108) target = $region20
        $region19: #{graph_pool.1} parent=15 // pred_region
          %s111 = smul.u32 4, %s11
          %p112 = scmp.lt.s32.totalorder %s111, 7
          %s113 = scalar_select %p112, %s111, 7
          %s114 = smul.addr %s113, 2
          %s115 = smul.addr %s114, 8
          %s116 = scalar_lea.vmem %s0, %s115
          %s117 = smul.u32 4, %s11
        $region20: #{graph_pool.1} parent=15 // pred_fallthru
          _
        // Predicated region
        $region21: #{graph_pool.1} parent=15 // pred_check
          %p118 = pneg %p57
        $region22: #{graph_pool.1} parent=15 // pred_check_branch
          %120 = sbr.rel (%p118) target = $region24
        $region23: #{graph_pool.1} parent=15 // pred_region
          %s121 = smul.u32 4, %s11
          %p122 = scmp.lt.s32.totalorder %s121, 7
          %s123 = scalar_select %p122, %s121, 7
          %s124 = smul.addr %s123, 4
          %s125 = scalar_lea.vmem %s1, %s124
          %s126 = smul.u32 4, %s11
        $region24: #{graph_pool.1} parent=15 // pred_fallthru
          _
      $region16: #{graph_pool.1} parent=5 // pred_fallthru
        _
      %p127 = scmp.le.s32.totalorder 1, %s11
      %p128 = scmp.lt.s32.totalorder %s11, 3
      %p129 = pnand %p127, %p128
      %p130 = pneg %p129
      // Predicated region
      $region25: #{graph_pool.1} parent=5 // pred_check
        _
      $region26: #{graph_pool.1} parent=5 // pred_check_branch
        %132 = sbr.rel (%p129) target = $region28
      $region27: #{graph_pool.1} parent=5 // pred_region
        %s133 = ssub.s32 %s11, 1
        %s134 = smul.u32 4, %s16
        %p135 = scmp.lt.s32.totalorder %s134, 7
        %s136 = scalar_select %p135, %s134, 7
        %s137 = smul.addr %s136, 2
        %s138 = smul.addr %s137, 8
        %s139 = scalar_lea.vmem %s0, %s138
        %p140 = pneg %p37
        %p141 = pneg %p34
        %s142 = smul.u32 4, %s16
        %p143 = scmp.lt.s32.totalorder %s142, 7
        %s144 = scalar_select %p143, %s142, 7
        %s145 = smul.addr %s144, 4
        %s146 = scalar_lea.vmem %s1, %s145
        %p147 = pneg %p63
        %p148 = pneg %p60
        %p149 = pneg %p89
        %p150 = pneg %p86
        %s151 = sand.u32 %s76, 1
        %s152 = scalar_lea.sflag [#allocation3], %s151
        %s153 = sand.u32 %s76, 1
        %s154 = smul.addr %s153, 64
        %s155 = scalar_lea.vmem [#allocation2], %s154
        %s156 = smul.u32 4, %s16
        %p157 = scmp.lt.s32.totalorder %s156, 7
        %s158 = scalar_select %p157, %s156, 7
        %s159 = smul.addr %s158, 2
        %s160 = smul.addr %s159, 8
        %s161 = scalar_lea.vmem %s0, %s160
        %s162 = smul.u32 4, %s16
        %s163 = smul.u32 4, %s16
        %p164 = scmp.lt.s32.totalorder %s163, 7
        %s165 = scalar_select %p164, %s163, 7
        %s166 = smul.addr %s165, 4
        %s167 = scalar_lea.vmem %s1, %s166
        %s168 = smul.u32 4, %s16
        %s169 = smul.u32 4, %s16
        %v170 = vld [vmem:[%s161] sm:$0xff]
        %v171 = vld [vmem:[%s161 + $0x8] sm:$0xff]
        %v172 = vld [vmem:[%s161 + $0x10] sm:$0xff]
        %v173 = vld [vmem:[%s161 + $0x18] sm:$0xff]
        %v174 = vld [vmem:[%s161 + $0x20] sm:$0xff]
        %v175 = vld [vmem:[%s161 + $0x28] sm:$0xff]
        %v176 = vld [vmem:[%s161 + $0x30] sm:$0xff]
        %v177 = vld [vmem:[%s161 + $0x38] sm:$0xff]
        %v178 = vld [vmem:[%s167] sm:$0xf]
        %v179 = vld [vmem:[%s167 + $0x4] sm:$0xf]
        %v180 = vld [vmem:[%s167 + $0x8] sm:$0xf]
        %v181 = vld [vmem:[%s167 + $0xc] sm:$0xf]
        %v182 = vlaneseq
        %v183 = vand.u32 %v182, 127
        %v184 = vperm.slane %v178, 0
        %v185 = vlaneseq
        %v186 = vshrl.u32 %v185, 7
        %188 = vset.pattern.permute.xlu0 %v186
        %189 = vperm.xlu0 %188, %v184
        %v190 = vpop.permute.xlu0 %189
        %v191 = vlaneseq
        %v192 = vshrl.u32 %v191, 7
        %v193 = vadd.s32 %v192, 8
        %194 = vset.pattern.permute.xlu0 %v193
        %195 = vperm.xlu0 %194, %v184
        %v196 = vpop.permute.xlu0 %195
        %v197 = vperm.slane %v179, 0
        %v198 = vlaneseq
        %v199 = vshrl.u32 %v198, 7
        %201 = vset.pattern.permute.xlu0 %v199
        %202 = vperm.xlu0 %201, %v197
        %v203 = vpop.permute.xlu0 %202
        %v204 = vlaneseq
        %v205 = vshrl.u32 %v204, 7
        %v206 = vadd.s32 %v205, 8
        %207 = vset.pattern.permute.xlu0 %v206
        %208 = vperm.xlu0 %207, %v197
        %v209 = vpop.permute.xlu0 %208
        %v210 = vperm.slane %v180, 0
        %v211 = vlaneseq
        %v212 = vshrl.u32 %v211, 7
        %214 = vset.pattern.permute.xlu0 %v212
        %215 = vperm.xlu0 %214, %v210
        %v216 = vpop.permute.xlu0 %215
        %v217 = vlaneseq
        %v218 = vshrl.u32 %v217, 7
        %v219 = vadd.s32 %v218, 8
        %220 = vset.pattern.permute.xlu0 %v219
        %221 = vperm.xlu0 %220, %v210
        %v222 = vpop.permute.xlu0 %221
        %v223 = vperm.slane %v181, 0
        %v224 = vlaneseq
        %v225 = vshrl.u32 %v224, 7
        %227 = vset.pattern.permute.xlu0 %v225
        %228 = vperm.xlu0 %227, %v223
        %v229 = vpop.permute.xlu0 %228
        %v230 = vlaneseq
        %v231 = vshrl.u32 %v230, 7
        %v232 = vadd.s32 %v231, 8
        %233 = vset.pattern.permute.xlu0 %v232
        %234 = vperm.xlu0 %233, %v223
        %v235 = vpop.permute.xlu0 %234
        %vm236 = vcmp.ne.s32.totalorder %v190, 4294967295
        %vm237 = vcmp.ne.s32.totalorder %v196, 4294967295
        %vm238 = vcmp.ne.s32.totalorder %v203, 4294967295
        %vm239 = vcmp.ne.s32.totalorder %v209, 4294967295
        %vm240 = vcmp.ne.s32.totalorder %v216, 4294967295
        %vm241 = vcmp.ne.s32.totalorder %v222, 4294967295
        %vm242 = vcmp.ne.s32.totalorder %v229, 4294967295
        %vm243 = vcmp.ne.s32.totalorder %v235, 4294967295
        %vm244 = vcmp.eq.s32.totalorder %v190, %v183
        %vm245 = vcmp.eq.s32.totalorder %v196, %v183
        %vm246 = vcmp.eq.s32.totalorder %v203, %v183
        %vm247 = vcmp.eq.s32.totalorder %v209, %v183
        %vm248 = vcmp.eq.s32.totalorder %v216, %v183
        %vm249 = vcmp.eq.s32.totalorder %v222, %v183
        %vm250 = vcmp.eq.s32.totalorder %v229, %v183
        %vm251 = vcmp.eq.s32.totalorder %v235, %v183
        %v252 = vsel %vm244, 1, 0
        %v253 = vsel %vm245, 1, 0
        %v254 = vsel %vm246, 1, 0
        %v255 = vsel %vm247, 1, 0
        %v256 = vsel %vm248, 1, 0
        %v257 = vsel %vm249, 1, 0
        %v258 = vsel %vm250, 1, 0
        %v259 = vsel %vm251, 1, 0
        %v260 = vcvt.s32.f32 %v252
        %v261 = vcvt.s32.f32 %v253
        %v262 = vcvt.s32.f32 %v254
        %v263 = vcvt.s32.f32 %v255
        %v264 = vcvt.s32.f32 %v256
        %v265 = vcvt.s32.f32 %v257
        %v266 = vcvt.s32.f32 %v258
        %v267 = vcvt.s32.f32 %v259
        %vm268 = vcmask 130048
        %v270 = vsel %vm268, %v260, 0
        %v273 = vsel %vm268, %v261, 0
        %275 = vmatpush.msra.mxu0 0.0
        %276 = vmatpush.msra.mxu0 0.0
        %277 = vmatpush.msra.mxu0 0.0
        %278 = vmatpush.msra.mxu0 0.0
        %279 = vmatpush.msra.mxu0 0.0
        %280 = vmatpush.msra.mxu0 0.0
        %281 = vmatpush.msra.mxu0 0.0
        %282 = vmatpush.msra.mxu0 0.0
        %283 = vmatpush.msra.mxu0 0.0
        %284 = vmatpush.msra.mxu0 0.0
        %285 = vmatpush.msra.mxu0 0.0
        %286 = vmatpush.msra.mxu0 0.0
        %287 = vmatpush.msra.mxu0 0.0
        %288 = vmatpush.msra.mxu0 0.0
        %289 = vmatpush.msra.mxu0 %v171
        %290 = vmatpush.msra.mxu0 %v170
        %291 = vmatmul.f32.gmra.mxu0 %v270
        %v292 = vpop.f32.mrf.mxu0
        %v293 = vadd.f32 0.0, %v292
        %294 = vmatmul.f32.gmra.mxu0 %v273
        %v295 = vpop.f32.mrf.mxu0
        %v296 = vadd.f32 0.0, %v295
        %297 = vdwg.mxu0
        %v299 = vsel %vm268, %v262, 0
        %v302 = vsel %vm268, %v263, 0
        %304 = vmatpush.msra.mxu0 0.0
        %305 = vmatpush.msra.mxu0 0.0
        %306 = vmatpush.msra.mxu0 0.0
        %307 = vmatpush.msra.mxu0 0.0
        %308 = vmatpush.msra.mxu0 0.0
        %309 = vmatpush.msra.mxu0 0.0
        %310 = vmatpush.msra.mxu0 0.0
        %311 = vmatpush.msra.mxu0 0.0
        %312 = vmatpush.msra.mxu0 0.0
        %313 = vmatpush.msra.mxu0 0.0
        %314 = vmatpush.msra.mxu0 0.0
        %315 = vmatpush.msra.mxu0 0.0
        %316 = vmatpush.msra.mxu0 0.0
        %317 = vmatpush.msra.mxu0 0.0
        %318 = vmatpush.msra.mxu0 %v173
        %319 = vmatpush.msra.mxu0 %v172
        %320 = vmatmul.f32.gmra.mxu0 %v299
        %v321 = vpop.f32.mrf.mxu0
        %v322 = vadd.f32 0.0, %v321
        %323 = vmatmul.f32.gmra.mxu0 %v302
        %v324 = vpop.f32.mrf.mxu0
        %v325 = vadd.f32 0.0, %v324
        %326 = vdwg.mxu0
        %v328 = vsel %vm268, %v264, 0
        %v331 = vsel %vm268, %v265, 0
        %333 = vmatpush.msra.mxu0 0.0
        %334 = vmatpush.msra.mxu0 0.0
        %335 = vmatpush.msra.mxu0 0.0
        %336 = vmatpush.msra.mxu0 0.0
        %337 = vmatpush.msra.mxu0 0.0
        %338 = vmatpush.msra.mxu0 0.0
        %339 = vmatpush.msra.mxu0 0.0
        %340 = vmatpush.msra.mxu0 0.0
        %341 = vmatpush.msra.mxu0 0.0
        %342 = vmatpush.msra.mxu0 0.0
        %343 = vmatpush.msra.mxu0 0.0
        %344 = vmatpush.msra.mxu0 0.0
        %345 = vmatpush.msra.mxu0 0.0
        %346 = vmatpush.msra.mxu0 0.0
        %347 = vmatpush.msra.mxu0 %v175
        %348 = vmatpush.msra.mxu0 %v174
        %349 = vmatmul.f32.gmra.mxu0 %v328
        %v350 = vpop.f32.mrf.mxu0
        %v351 = vadd.f32 0.0, %v350
        %352 = vmatmul.f32.gmra.mxu0 %v331
        %v353 = vpop.f32.mrf.mxu0
        %v354 = vadd.f32 0.0, %v353
        %355 = vdwg.mxu0
        %v357 = vsel %vm268, %v266, 0
        %v360 = vsel %vm268, %v267, 0
        %362 = vmatpush.msra.mxu0 0.0
        %363 = vmatpush.msra.mxu0 0.0
        %364 = vmatpush.msra.mxu0 0.0
        %365 = vmatpush.msra.mxu0 0.0
        %366 = vmatpush.msra.mxu0 0.0
        %367 = vmatpush.msra.mxu0 0.0
        %368 = vmatpush.msra.mxu0 0.0
        %369 = vmatpush.msra.mxu0 0.0
        %370 = vmatpush.msra.mxu0 0.0
        %371 = vmatpush.msra.mxu0 0.0
        %372 = vmatpush.msra.mxu0 0.0
        %373 = vmatpush.msra.mxu0 0.0
        %374 = vmatpush.msra.mxu0 0.0
        %375 = vmatpush.msra.mxu0 0.0
        %376 = vmatpush.msra.mxu0 %v177
        %377 = vmatpush.msra.mxu0 %v176
        %378 = vmatmul.f32.gmra.mxu0 %v357
        %v379 = vpop.f32.mrf.mxu0
        %v380 = vadd.f32 0.0, %v379
        %381 = vmatmul.f32.gmra.mxu0 %v360
        %v382 = vpop.f32.mrf.mxu0
        %v383 = vadd.f32 0.0, %v382
        %384 = vdwg.mxu0
        %v385 = vsel %vm236, 1, 0
        %v386 = vsel %vm237, 1, 0
        %v387 = vsel %vm238, 1, 0
        %v388 = vsel %vm239, 1, 0
        %v389 = vsel %vm240, 1, 0
        %v390 = vsel %vm241, 1, 0
        %v391 = vsel %vm242, 1, 0
        %v392 = vsel %vm243, 1, 0
        %vm393 = vcmp.eq.s32.totalorder %v385, 1
        %vm394 = vcmp.eq.s32.totalorder %v386, 1
        %vm395 = vcmp.eq.s32.totalorder %v387, 1
        %vm396 = vcmp.eq.s32.totalorder %v388, 1
        %vm397 = vcmp.eq.s32.totalorder %v389, 1
        %vm398 = vcmp.eq.s32.totalorder %v390, 1
        %vm399 = vcmp.eq.s32.totalorder %v391, 1
        %vm400 = vcmp.eq.s32.totalorder %v392, 1
        %v401 = vsel %vm393, %v293, -inf
        %v402 = vsel %vm394, %v296, -inf
        %v403 = vsel %vm395, %v322, -inf
        %v404 = vsel %vm396, %v325, -inf
        %v405 = vsel %vm397, %v351, -inf
        %v406 = vsel %vm398, %v354, -inf
        %v407 = vsel %vm399, %v380, -inf
        %v408 = vsel %vm400, %v383, -inf
        %v409 = vmax.f32 %v170, %v401
        %v410 = vmax.f32 %v171, %v402
        %v411 = vmax.f32 %v172, %v403
        %v412 = vmax.f32 %v173, %v404
        %v413 = vmax.f32 %v174, %v405
        %v414 = vmax.f32 %v175, %v406
        %v415 = vmax.f32 %v176, %v407
        %v416 = vmax.f32 %v177, %v408
        %v417 = vperm.slane %v178, 1
        %v418 = vlaneseq
        %v419 = vshrl.u32 %v418, 7
        %421 = vset.pattern.permute.xlu0 %v419
        %422 = vperm.xlu0 %421, %v417
        %v423 = vpop.permute.xlu0 %422
        %v424 = vlaneseq
        %v425 = vshrl.u32 %v424, 7
        %v426 = vadd.s32 %v425, 8
        %427 = vset.pattern.permute.xlu0 %v426
        %428 = vperm.xlu0 %427, %v417
        %v429 = vpop.permute.xlu0 %428
        %v430 = vperm.slane %v179, 1
        %v431 = vlaneseq
        %v432 = vshrl.u32 %v431, 7
        %434 = vset.pattern.permute.xlu0 %v432
        %435 = vperm.xlu0 %434, %v430
        %v436 = vpop.permute.xlu0 %435
        %v437 = vlaneseq
        %v438 = vshrl.u32 %v437, 7
        %v439 = vadd.s32 %v438, 8
        %440 = vset.pattern.permute.xlu0 %v439
        %441 = vperm.xlu0 %440, %v430
        %v442 = vpop.permute.xlu0 %441
        %v443 = vperm.slane %v180, 1
        %v444 = vlaneseq
        %v445 = vshrl.u32 %v444, 7
        %447 = vset.pattern.permute.xlu0 %v445
        %448 = vperm.xlu0 %447, %v443
        %v449 = vpop.permute.xlu0 %448
        %v450 = vlaneseq
        %v451 = vshrl.u32 %v450, 7
        %v452 = vadd.s32 %v451, 8
        %453 = vset.pattern.permute.xlu0 %v452
        %454 = vperm.xlu0 %453, %v443
        %v455 = vpop.permute.xlu0 %454
        %v456 = vperm.slane %v181, 1
        %v457 = vlaneseq
        %v458 = vshrl.u32 %v457, 7
        %460 = vset.pattern.permute.xlu0 %v458
        %461 = vperm.xlu0 %460, %v456
        %v462 = vpop.permute.xlu0 %461
        %v463 = vlaneseq
        %v464 = vshrl.u32 %v463, 7
        %v465 = vadd.s32 %v464, 8
        %466 = vset.pattern.permute.xlu0 %v465
        %467 = vperm.xlu0 %466, %v456
        %v468 = vpop.permute.xlu0 %467
        %vm469 = vcmp.ne.s32.totalorder %v423, 4294967295
        %vm470 = vcmp.ne.s32.totalorder %v429, 4294967295
        %vm471 = vcmp.ne.s32.totalorder %v436, 4294967295
        %vm472 = vcmp.ne.s32.totalorder %v442, 4294967295
        %vm473 = vcmp.ne.s32.totalorder %v449, 4294967295
        %vm474 = vcmp.ne.s32.totalorder %v455, 4294967295
        %vm475 = vcmp.ne.s32.totalorder %v462, 4294967295
        %vm476 = vcmp.ne.s32.totalorder %v468, 4294967295
        %vm477 = vcmp.eq.s32.totalorder %v423, %v183
        %vm478 = vcmp.eq.s32.totalorder %v429, %v183
        %vm479 = vcmp.eq.s32.totalorder %v436, %v183
        %vm480 = vcmp.eq.s32.totalorder %v442, %v183
        %vm481 = vcmp.eq.s32.totalorder %v449, %v183
        %vm482 = vcmp.eq.s32.totalorder %v455, %v183
        %vm483 = vcmp.eq.s32.totalorder %v462, %v183
        %vm484 = vcmp.eq.s32.totalorder %v468, %v183
        %v485 = vsel %vm477, 1, 0
        %v486 = vsel %vm478, 1, 0
        %v487 = vsel %vm479, 1, 0
        %v488 = vsel %vm480, 1, 0
        %v489 = vsel %vm481, 1, 0
        %v490 = vsel %vm482, 1, 0
        %v491 = vsel %vm483, 1, 0
        %v492 = vsel %vm484, 1, 0
        %v493 = vcvt.s32.f32 %v485
        %v494 = vcvt.s32.f32 %v486
        %v495 = vcvt.s32.f32 %v487
        %v496 = vcvt.s32.f32 %v488
        %v497 = vcvt.s32.f32 %v489
        %v498 = vcvt.s32.f32 %v490
        %v499 = vcvt.s32.f32 %v491
        %v500 = vcvt.s32.f32 %v492
        %v502 = vsel %vm268, %v493, 0
        %v505 = vsel %vm268, %v494, 0
        %507 = vmatpush.msra.mxu0 0.0
        %508 = vmatpush.msra.mxu0 0.0
        %509 = vmatpush.msra.mxu0 0.0
        %510 = vmatpush.msra.mxu0 0.0
        %511 = vmatpush.msra.mxu0 0.0
        %512 = vmatpush.msra.mxu0 0.0
        %513 = vmatpush.msra.mxu0 0.0
        %514 = vmatpush.msra.mxu0 0.0
        %515 = vmatpush.msra.mxu0 0.0
        %516 = vmatpush.msra.mxu0 0.0
        %517 = vmatpush.msra.mxu0 0.0
        %518 = vmatpush.msra.mxu0 0.0
        %519 = vmatpush.msra.mxu0 0.0
        %520 = vmatpush.msra.mxu0 0.0
        %521 = vmatpush.msra.mxu0 %v171
        %522 = vmatpush.msra.mxu0 %v170
        %523 = vmatmul.f32.gmra.mxu0 %v502
        %v524 = vpop.f32.mrf.mxu0
        %v525 = vadd.f32 0.0, %v524
        %526 = vmatmul.f32.gmra.mxu0 %v505
        %v527 = vpop.f32.mrf.mxu0
        %v528 = vadd.f32 0.0, %v527
        %529 = vdwg.mxu0
        %v531 = vsel %vm268, %v495, 0
        %v534 = vsel %vm268, %v496, 0
        %536 = vmatpush.msra.mxu0 0.0
        %537 = vmatpush.msra.mxu0 0.0
        %538 = vmatpush.msra.mxu0 0.0
        %539 = vmatpush.msra.mxu0 0.0
        %540 = vmatpush.msra.mxu0 0.0
        %541 = vmatpush.msra.mxu0 0.0
        %542 = vmatpush.msra.mxu0 0.0
        %543 = vmatpush.msra.mxu0 0.0
        %544 = vmatpush.msra.mxu0 0.0
        %545 = vmatpush.msra.mxu0 0.0
        %546 = vmatpush.msra.mxu0 0.0
        %547 = vmatpush.msra.mxu0 0.0
        %548 = vmatpush.msra.mxu0 0.0
        %549 = vmatpush.msra.mxu0 0.0
        %550 = vmatpush.msra.mxu0 %v173
        %551 = vmatpush.msra.mxu0 %v172
        %552 = vmatmul.f32.gmra.mxu0 %v531
        %v553 = vpop.f32.mrf.mxu0
        %v554 = vadd.f32 0.0, %v553
        %555 = vmatmul.f32.gmra.mxu0 %v534
        %v556 = vpop.f32.mrf.mxu0
        %v557 = vadd.f32 0.0, %v556
        %558 = vdwg.mxu0
        %v560 = vsel %vm268, %v497, 0
        %v563 = vsel %vm268, %v498, 0
        %565 = vmatpush.msra.mxu0 0.0
        %566 = vmatpush.msra.mxu0 0.0
        %567 = vmatpush.msra.mxu0 0.0
        %568 = vmatpush.msra.mxu0 0.0
        %569 = vmatpush.msra.mxu0 0.0
        %570 = vmatpush.msra.mxu0 0.0
        %571 = vmatpush.msra.mxu0 0.0
        %572 = vmatpush.msra.mxu0 0.0
        %573 = vmatpush.msra.mxu0 0.0
        %574 = vmatpush.msra.mxu0 0.0
        %575 = vmatpush.msra.mxu0 0.0
        %576 = vmatpush.msra.mxu0 0.0
        %577 = vmatpush.msra.mxu0 0.0
        %578 = vmatpush.msra.mxu0 0.0
        %579 = vmatpush.msra.mxu0 %v175
        %580 = vmatpush.msra.mxu0 %v174
        %581 = vmatmul.f32.gmra.mxu0 %v560
        %v582 = vpop.f32.mrf.mxu0
        %v583 = vadd.f32 0.0, %v582
        %584 = vmatmul.f32.gmra.mxu0 %v563
        %v585 = vpop.f32.mrf.mxu0
        %v586 = vadd.f32 0.0, %v585
        %587 = vdwg.mxu0
        %v589 = vsel %vm268, %v499, 0
        %v592 = vsel %vm268, %v500, 0
        %594 = vmatpush.msra.mxu0 0.0
        %595 = vmatpush.msra.mxu0 0.0
        %596 = vmatpush.msra.mxu0 0.0
        %597 = vmatpush.msra.mxu0 0.0
        %598 = vmatpush.msra.mxu0 0.0
        %599 = vmatpush.msra.mxu0 0.0
        %600 = vmatpush.msra.mxu0 0.0
        %601 = vmatpush.msra.mxu0 0.0
        %602 = vmatpush.msra.mxu0 0.0
        %603 = vmatpush.msra.mxu0 0.0
        %604 = vmatpush.msra.mxu0 0.0
        %605 = vmatpush.msra.mxu0 0.0
        %606 = vmatpush.msra.mxu0 0.0
        %607 = vmatpush.msra.mxu0 0.0
        %608 = vmatpush.msra.mxu0 %v177
        %609 = vmatpush.msra.mxu0 %v176
        %610 = vmatmul.f32.gmra.mxu0 %v589
        %v611 = vpop.f32.mrf.mxu0
        %v612 = vadd.f32 0.0, %v611
        %613 = vmatmul.f32.gmra.mxu0 %v592
        %v614 = vpop.f32.mrf.mxu0
        %v615 = vadd.f32 0.0, %v614
        %616 = vdwg.mxu0
        %v617 = vsel %vm469, 1, 0
        %v618 = vsel %vm470, 1, 0
        %v619 = vsel %vm471, 1, 0
        %v620 = vsel %vm472, 1, 0
        %v621 = vsel %vm473, 1, 0
        %v622 = vsel %vm474, 1, 0
        %v623 = vsel %vm475, 1, 0
        %v624 = vsel %vm476, 1, 0
        %vm625 = vcmp.eq.s32.totalorder %v617, 1
        %vm626 = vcmp.eq.s32.totalorder %v618, 1
        %vm627 = vcmp.eq.s32.totalorder %v619, 1
        %vm628 = vcmp.eq.s32.totalorder %v620, 1
        %vm629 = vcmp.eq.s32.totalorder %v621, 1
        %vm630 = vcmp.eq.s32.totalorder %v622, 1
        %vm631 = vcmp.eq.s32.totalorder %v623, 1
        %vm632 = vcmp.eq.s32.totalorder %v624, 1
        %v633 = vsel %vm625, %v525, -inf
        %v634 = vsel %vm626, %v528, -inf
        %v635 = vsel %vm627, %v554, -inf
        %v636 = vsel %vm628, %v557, -inf
        %v637 = vsel %vm629, %v583, -inf
        %v638 = vsel %vm630, %v586, -inf
        %v639 = vsel %vm631, %v612, -inf
        %v640 = vsel %vm632, %v615, -inf
        %v641 = vmax.f32 %v409, %v633
        %v642 = vmax.f32 %v410, %v634
        %v643 = vmax.f32 %v411, %v635
        %v644 = vmax.f32 %v412, %v636
        %v645 = vmax.f32 %v413, %v637
        %v646 = vmax.f32 %v414, %v638
        %v647 = vmax.f32 %v415, %v639
        %v648 = vmax.f32 %v416, %v640
        %vm649 = vmor %vm236, %vm469
        %vm650 = vmor %vm237, %vm470
        %vm651 = vmor %vm238, %vm471
        %vm652 = vmor %vm239, %vm472
        %vm653 = vmor %vm240, %vm473
        %vm654 = vmor %vm241, %vm474
        %vm655 = vmor %vm242, %vm475
        %vm656 = vmor %vm243, %vm476
        %v657 = vperm.slane %v178, 2
        %v658 = vlaneseq
        %v659 = vshrl.u32 %v658, 7
        %661 = vset.pattern.permute.xlu0 %v659
        %662 = vperm.xlu0 %661, %v657
        %v663 = vpop.permute.xlu0 %662
        %v664 = vlaneseq
        %v665 = vshrl.u32 %v664, 7
        %v666 = vadd.s32 %v665, 8
        %667 = vset.pattern.permute.xlu0 %v666
        %668 = vperm.xlu0 %667, %v657
        %v669 = vpop.permute.xlu0 %668
        %v670 = vperm.slane %v179, 2
        %v671 = vlaneseq
        %v672 = vshrl.u32 %v671, 7
        %674 = vset.pattern.permute.xlu0 %v672
        %675 = vperm.xlu0 %674, %v670
        %v676 = vpop.permute.xlu0 %675
        %v677 = vlaneseq
        %v678 = vshrl.u32 %v677, 7
        %v679 = vadd.s32 %v678, 8
        %680 = vset.pattern.permute.xlu0 %v679
        %681 = vperm.xlu0 %680, %v670
        %v682 = vpop.permute.xlu0 %681
        %v683 = vperm.slane %v180, 2
        %v684 = vlaneseq
        %v685 = vshrl.u32 %v684, 7
        %687 = vset.pattern.permute.xlu0 %v685
        %688 = vperm.xlu0 %687, %v683
        %v689 = vpop.permute.xlu0 %688
        %v690 = vlaneseq
        %v691 = vshrl.u32 %v690, 7
        %v692 = vadd.s32 %v691, 8
        %693 = vset.pattern.permute.xlu0 %v692
        %694 = vperm.xlu0 %693, %v683
        %v695 = vpop.permute.xlu0 %694
        %v696 = vperm.slane %v181, 2
        %v697 = vlaneseq
        %v698 = vshrl.u32 %v697, 7
        %700 = vset.pattern.permute.xlu0 %v698
        %701 = vperm.xlu0 %700, %v696
        %v702 = vpop.permute.xlu0 %701
        %v703 = vlaneseq
        %v704 = vshrl.u32 %v703, 7
        %v705 = vadd.s32 %v704, 8
        %706 = vset.pattern.permute.xlu0 %v705
        %707 = vperm.xlu0 %706, %v696
        %v708 = vpop.permute.xlu0 %707
        %vm709 = vcmp.ne.s32.totalorder %v663, 4294967295
        %vm710 = vcmp.ne.s32.totalorder %v669, 4294967295
        %vm711 = vcmp.ne.s32.totalorder %v676, 4294967295
        %vm712 = vcmp.ne.s32.totalorder %v682, 4294967295
        %vm713 = vcmp.ne.s32.totalorder %v689, 4294967295
        %vm714 = vcmp.ne.s32.totalorder %v695, 4294967295
        %vm715 = vcmp.ne.s32.totalorder %v702, 4294967295
        %vm716 = vcmp.ne.s32.totalorder %v708, 4294967295
        %vm717 = vcmp.eq.s32.totalorder %v663, %v183
        %vm718 = vcmp.eq.s32.totalorder %v669, %v183
        %vm719 = vcmp.eq.s32.totalorder %v676, %v183
        %vm720 = vcmp.eq.s32.totalorder %v682, %v183
        %vm721 = vcmp.eq.s32.totalorder %v689, %v183
        %vm722 = vcmp.eq.s32.totalorder %v695, %v183
        %vm723 = vcmp.eq.s32.totalorder %v702, %v183
        %vm724 = vcmp.eq.s32.totalorder %v708, %v183
        %v725 = vsel %vm717, 1, 0
        %v726 = vsel %vm718, 1, 0
        %v727 = vsel %vm719, 1, 0
        %v728 = vsel %vm720, 1, 0
        %v729 = vsel %vm721, 1, 0
        %v730 = vsel %vm722, 1, 0
        %v731 = vsel %vm723, 1, 0
        %v732 = vsel %vm724, 1, 0
        %v733 = vcvt.s32.f32 %v725
        %v734 = vcvt.s32.f32 %v726
        %v735 = vcvt.s32.f32 %v727
        %v736 = vcvt.s32.f32 %v728
        %v737 = vcvt.s32.f32 %v729
        %v738 = vcvt.s32.f32 %v730
        %v739 = vcvt.s32.f32 %v731
        %v740 = vcvt.s32.f32 %v732
        %v742 = vsel %vm268, %v733, 0
        %v745 = vsel %vm268, %v734, 0
        %747 = vmatpush.msra.mxu0 0.0
        %748 = vmatpush.msra.mxu0 0.0
        %749 = vmatpush.msra.mxu0 0.0
        %750 = vmatpush.msra.mxu0 0.0
        %751 = vmatpush.msra.mxu0 0.0
        %752 = vmatpush.msra.mxu0 0.0
        %753 = vmatpush.msra.mxu0 0.0
        %754 = vmatpush.msra.mxu0 0.0
        %755 = vmatpush.msra.mxu0 0.0
        %756 = vmatpush.msra.mxu0 0.0
        %757 = vmatpush.msra.mxu0 0.0
        %758 = vmatpush.msra.mxu0 0.0
        %759 = vmatpush.msra.mxu0 0.0
        %760 = vmatpush.msra.mxu0 0.0
        %761 = vmatpush.msra.mxu0 %v171
        %762 = vmatpush.msra.mxu0 %v170
        %763 = vmatmul.f32.gmra.mxu0 %v742
        %v764 = vpop.f32.mrf.mxu0
        %v765 = vadd.f32 0.0, %v764
        %766 = vmatmul.f32.gmra.mxu0 %v745
        %v767 = vpop.f32.mrf.mxu0
        %v768 = vadd.f32 0.0, %v767
        %769 = vdwg.mxu0
        %v771 = vsel %vm268, %v735, 0
        %v774 = vsel %vm268, %v736, 0
        %776 = vmatpush.msra.mxu0 0.0
        %777 = vmatpush.msra.mxu0 0.0
        %778 = vmatpush.msra.mxu0 0.0
        %779 = vmatpush.msra.mxu0 0.0
        %780 = vmatpush.msra.mxu0 0.0
        %781 = vmatpush.msra.mxu0 0.0
        %782 = vmatpush.msra.mxu0 0.0
        %783 = vmatpush.msra.mxu0 0.0
        %784 = vmatpush.msra.mxu0 0.0
        %785 = vmatpush.msra.mxu0 0.0
        %786 = vmatpush.msra.mxu0 0.0
        %787 = vmatpush.msra.mxu0 0.0
        %788 = vmatpush.msra.mxu0 0.0
        %789 = vmatpush.msra.mxu0 0.0
        %790 = vmatpush.msra.mxu0 %v173
        %791 = vmatpush.msra.mxu0 %v172
        %792 = vmatmul.f32.gmra.mxu0 %v771
        %v793 = vpop.f32.mrf.mxu0
        %v794 = vadd.f32 0.0, %v793
        %795 = vmatmul.f32.gmra.mxu0 %v774
        %v796 = vpop.f32.mrf.mxu0
        %v797 = vadd.f32 0.0, %v796
        %798 = vdwg.mxu0
        %v800 = vsel %vm268, %v737, 0
        %v803 = vsel %vm268, %v738, 0
        %805 = vmatpush.msra.mxu0 0.0
        %806 = vmatpush.msra.mxu0 0.0
        %807 = vmatpush.msra.mxu0 0.0
        %808 = vmatpush.msra.mxu0 0.0
        %809 = vmatpush.msra.mxu0 0.0
        %810 = vmatpush.msra.mxu0 0.0
        %811 = vmatpush.msra.mxu0 0.0
        %812 = vmatpush.msra.mxu0 0.0
        %813 = vmatpush.msra.mxu0 0.0
        %814 = vmatpush.msra.mxu0 0.0
        %815 = vmatpush.msra.mxu0 0.0
        %816 = vmatpush.msra.mxu0 0.0
        %817 = vmatpush.msra.mxu0 0.0
        %818 = vmatpush.msra.mxu0 0.0
        %819 = vmatpush.msra.mxu0 %v175
        %820 = vmatpush.msra.mxu0 %v174
        %821 = vmatmul.f32.gmra.mxu0 %v800
        %v822 = vpop.f32.mrf.mxu0
        %v823 = vadd.f32 0.0, %v822
        %824 = vmatmul.f32.gmra.mxu0 %v803
        %v825 = vpop.f32.mrf.mxu0
        %v826 = vadd.f32 0.0, %v825
        %827 = vdwg.mxu0
        %v829 = vsel %vm268, %v739, 0
        %v832 = vsel %vm268, %v740, 0
        %834 = vmatpush.msra.mxu0 0.0
        %835 = vmatpush.msra.mxu0 0.0
        %836 = vmatpush.msra.mxu0 0.0
        %837 = vmatpush.msra.mxu0 0.0
        %838 = vmatpush.msra.mxu0 0.0
        %839 = vmatpush.msra.mxu0 0.0
        %840 = vmatpush.msra.mxu0 0.0
        %841 = vmatpush.msra.mxu0 0.0
        %842 = vmatpush.msra.mxu0 0.0
        %843 = vmatpush.msra.mxu0 0.0
        %844 = vmatpush.msra.mxu0 0.0
        %845 = vmatpush.msra.mxu0 0.0
        %846 = vmatpush.msra.mxu0 0.0
        %847 = vmatpush.msra.mxu0 0.0
        %848 = vmatpush.msra.mxu0 %v177
        %849 = vmatpush.msra.mxu0 %v176
        %850 = vmatmul.f32.gmra.mxu0 %v829
        %v851 = vpop.f32.mrf.mxu0
        %v852 = vadd.f32 0.0, %v851
        %853 = vmatmul.f32.gmra.mxu0 %v832
        %v854 = vpop.f32.mrf.mxu0
        %v855 = vadd.f32 0.0, %v854
        %856 = vdwg.mxu0
        %v857 = vsel %vm709, 1, 0
        %v858 = vsel %vm710, 1, 0
        %v859 = vsel %vm711, 1, 0
        %v860 = vsel %vm712, 1, 0
        %v861 = vsel %vm713, 1, 0
        %v862 = vsel %vm714, 1, 0
        %v863 = vsel %vm715, 1, 0
        %v864 = vsel %vm716, 1, 0
        %vm865 = vcmp.eq.s32.totalorder %v857, 1
        %vm866 = vcmp.eq.s32.totalorder %v858, 1
        %vm867 = vcmp.eq.s32.totalorder %v859, 1
        %vm868 = vcmp.eq.s32.totalorder %v860, 1
        %vm869 = vcmp.eq.s32.totalorder %v861, 1
        %vm870 = vcmp.eq.s32.totalorder %v862, 1
        %vm871 = vcmp.eq.s32.totalorder %v863, 1
        %vm872 = vcmp.eq.s32.totalorder %v864, 1
        %v873 = vsel %vm865, %v765, -inf
        %v874 = vsel %vm866, %v768, -inf
        %v875 = vsel %vm867, %v794, -inf
        %v876 = vsel %vm868, %v797, -inf
        %v877 = vsel %vm869, %v823, -inf
        %v878 = vsel %vm870, %v826, -inf
        %v879 = vsel %vm871, %v852, -inf
        %v880 = vsel %vm872, %v855, -inf
        %v881 = vmax.f32 %v641, %v873
        %v882 = vmax.f32 %v642, %v874
        %v883 = vmax.f32 %v643, %v875
        %v884 = vmax.f32 %v644, %v876
        %v885 = vmax.f32 %v645, %v877
        %v886 = vmax.f32 %v646, %v878
        %v887 = vmax.f32 %v647, %v879
        %v888 = vmax.f32 %v648, %v880
        %vm889 = vmor %vm649, %vm709
        %vm890 = vmor %vm650, %vm710
        %vm891 = vmor %vm651, %vm711
        %vm892 = vmor %vm652, %vm712
        %vm893 = vmor %vm653, %vm713
        %vm894 = vmor %vm654, %vm714
        %vm895 = vmor %vm655, %vm715
        %vm896 = vmor %vm656, %vm716
        %v897 = vperm.slane %v178, 3
        %v898 = vlaneseq
        %v899 = vshrl.u32 %v898, 7
        %901 = vset.pattern.permute.xlu0 %v899
        %902 = vperm.xlu0 %901, %v897
        %v903 = vpop.permute.xlu0 %902
        %v904 = vlaneseq
        %v905 = vshrl.u32 %v904, 7
        %v906 = vadd.s32 %v905, 8
        %907 = vset.pattern.permute.xlu0 %v906
        %908 = vperm.xlu0 %907, %v897
        %v909 = vpop.permute.xlu0 %908
        %v910 = vperm.slane %v179, 3
        %v911 = vlaneseq
        %v912 = vshrl.u32 %v911, 7
        %914 = vset.pattern.permute.xlu0 %v912
        %915 = vperm.xlu0 %914, %v910
        %v916 = vpop.permute.xlu0 %915
        %v917 = vlaneseq
        %v918 = vshrl.u32 %v917, 7
        %v919 = vadd.s32 %v918, 8
        %920 = vset.pattern.permute.xlu0 %v919
        %921 = vperm.xlu0 %920, %v910
        %v922 = vpop.permute.xlu0 %921
        %v923 = vperm.slane %v180, 3
        %v924 = vlaneseq
        %v925 = vshrl.u32 %v924, 7
        %927 = vset.pattern.permute.xlu0 %v925
        %928 = vperm.xlu0 %927, %v923
        %v929 = vpop.permute.xlu0 %928
        %v930 = vlaneseq
        %v931 = vshrl.u32 %v930, 7
        %v932 = vadd.s32 %v931, 8
        %933 = vset.pattern.permute.xlu0 %v932
        %934 = vperm.xlu0 %933, %v923
        %v935 = vpop.permute.xlu0 %934
        %v936 = vperm.slane %v181, 3
        %v937 = vlaneseq
        %v938 = vshrl.u32 %v937, 7
        %940 = vset.pattern.permute.xlu0 %v938
        %941 = vperm.xlu0 %940, %v936
        %v942 = vpop.permute.xlu0 %941
        %v943 = vlaneseq
        %v944 = vshrl.u32 %v943, 7
        %v945 = vadd.s32 %v944, 8
        %946 = vset.pattern.permute.xlu0 %v945
        %947 = vperm.xlu0 %946, %v936
        %v948 = vpop.permute.xlu0 %947
        %vm949 = vcmp.ne.s32.totalorder %v903, 4294967295
        %vm950 = vcmp.ne.s32.totalorder %v909, 4294967295
        %vm951 = vcmp.ne.s32.totalorder %v916, 4294967295
        %vm952 = vcmp.ne.s32.totalorder %v922, 4294967295
        %vm953 = vcmp.ne.s32.totalorder %v929, 4294967295
        %vm954 = vcmp.ne.s32.totalorder %v935, 4294967295
        %vm955 = vcmp.ne.s32.totalorder %v942, 4294967295
        %vm956 = vcmp.ne.s32.totalorder %v948, 4294967295
        %vm957 = vcmp.eq.s32.totalorder %v903, %v183
        %vm958 = vcmp.eq.s32.totalorder %v909, %v183
        %vm959 = vcmp.eq.s32.totalorder %v916, %v183
        %vm960 = vcmp.eq.s32.totalorder %v922, %v183
        %vm961 = vcmp.eq.s32.totalorder %v929, %v183
        %vm962 = vcmp.eq.s32.totalorder %v935, %v183
        %vm963 = vcmp.eq.s32.totalorder %v942, %v183
        %vm964 = vcmp.eq.s32.totalorder %v948, %v183
        %v965 = vsel %vm957, 1, 0
        %v966 = vsel %vm958, 1, 0
        %v967 = vsel %vm959, 1, 0
        %v968 = vsel %vm960, 1, 0
        %v969 = vsel %vm961, 1, 0
        %v970 = vsel %vm962, 1, 0
        %v971 = vsel %vm963, 1, 0
        %v972 = vsel %vm964, 1, 0
        %v973 = vcvt.s32.f32 %v965
        %v974 = vcvt.s32.f32 %v966
        %v975 = vcvt.s32.f32 %v967
        %v976 = vcvt.s32.f32 %v968
        %v977 = vcvt.s32.f32 %v969
        %v978 = vcvt.s32.f32 %v970
        %v979 = vcvt.s32.f32 %v971
        %v980 = vcvt.s32.f32 %v972
        %v982 = vsel %vm268, %v973, 0
        %v985 = vsel %vm268, %v974, 0
        %987 = vmatpush.msra.mxu0 0.0
        %988 = vmatpush.msra.mxu0 0.0
        %989 = vmatpush.msra.mxu0 0.0
        %990 = vmatpush.msra.mxu0 0.0
        %991 = vmatpush.msra.mxu0 0.0
        %992 = vmatpush.msra.mxu0 0.0
        %993 = vmatpush.msra.mxu0 0.0
        %994 = vmatpush.msra.mxu0 0.0
        %995 = vmatpush.msra.mxu0 0.0
        %996 = vmatpush.msra.mxu0 0.0
        %997 = vmatpush.msra.mxu0 0.0
        %998 = vmatpush.msra.mxu0 0.0
        %999 = vmatpush.msra.mxu0 0.0
        %1000 = vmatpush.msra.mxu0 0.0
        %1001 = vmatpush.msra.mxu0 %v171
        %1002 = vmatpush.msra.mxu0 %v170
        %1003 = vmatmul.f32.gmra.mxu0 %v982
        %v1004 = vpop.f32.mrf.mxu0
        %v1005 = vadd.f32 0.0, %v1004
        %1006 = vmatmul.f32.gmra.mxu0 %v985
        %v1007 = vpop.f32.mrf.mxu0
        %v1008 = vadd.f32 0.0, %v1007
        %1009 = vdwg.mxu0
        %v1011 = vsel %vm268, %v975, 0
        %v1014 = vsel %vm268, %v976, 0
        %1016 = vmatpush.msra.mxu0 0.0
        %1017 = vmatpush.msra.mxu0 0.0
        %1018 = vmatpush.msra.mxu0 0.0
        %1019 = vmatpush.msra.mxu0 0.0
        %1020 = vmatpush.msra.mxu0 0.0
        %1021 = vmatpush.msra.mxu0 0.0
        %1022 = vmatpush.msra.mxu0 0.0
        %1023 = vmatpush.msra.mxu0 0.0
        %1024 = vmatpush.msra.mxu0 0.0
        %1025 = vmatpush.msra.mxu0 0.0
        %1026 = vmatpush.msra.mxu0 0.0
        %1027 = vmatpush.msra.mxu0 0.0
        %1028 = vmatpush.msra.mxu0 0.0
        %1029 = vmatpush.msra.mxu0 0.0
        %1030 = vmatpush.msra.mxu0 %v173
        %1031 = vmatpush.msra.mxu0 %v172
        %1032 = vmatmul.f32.gmra.mxu0 %v1011
        %v1033 = vpop.f32.mrf.mxu0
        %v1034 = vadd.f32 0.0, %v1033
        %1035 = vmatmul.f32.gmra.mxu0 %v1014
        %v1036 = vpop.f32.mrf.mxu0
        %v1037 = vadd.f32 0.0, %v1036
        %1038 = vdwg.mxu0
        %v1040 = vsel %vm268, %v977, 0
        %v1043 = vsel %vm268, %v978, 0
        %1045 = vmatpush.msra.mxu0 0.0
        %1046 = vmatpush.msra.mxu0 0.0
        %1047 = vmatpush.msra.mxu0 0.0
        %1048 = vmatpush.msra.mxu0 0.0
        %1049 = vmatpush.msra.mxu0 0.0
        %1050 = vmatpush.msra.mxu0 0.0
        %1051 = vmatpush.msra.mxu0 0.0
        %1052 = vmatpush.msra.mxu0 0.0
        %1053 = vmatpush.msra.mxu0 0.0
        %1054 = vmatpush.msra.mxu0 0.0
        %1055 = vmatpush.msra.mxu0 0.0
        %1056 = vmatpush.msra.mxu0 0.0
        %1057 = vmatpush.msra.mxu0 0.0
        %1058 = vmatpush.msra.mxu0 0.0
        %1059 = vmatpush.msra.mxu0 %v175
        %1060 = vmatpush.msra.mxu0 %v174
        %1061 = vmatmul.f32.gmra.mxu0 %v1040
        %v1062 = vpop.f32.mrf.mxu0
        %v1063 = vadd.f32 0.0, %v1062
        %1064 = vmatmul.f32.gmra.mxu0 %v1043
        %v1065 = vpop.f32.mrf.mxu0
        %v1066 = vadd.f32 0.0, %v1065
        %1067 = vdwg.mxu0
        %v1069 = vsel %vm268, %v979, 0
        %v1072 = vsel %vm268, %v980, 0
        %1074 = vmatpush.msra.mxu0 0.0
        %1075 = vmatpush.msra.mxu0 0.0
        %1076 = vmatpush.msra.mxu0 0.0
        %1077 = vmatpush.msra.mxu0 0.0
        %1078 = vmatpush.msra.mxu0 0.0
        %1079 = vmatpush.msra.mxu0 0.0
        %1080 = vmatpush.msra.mxu0 0.0
        %1081 = vmatpush.msra.mxu0 0.0
        %1082 = vmatpush.msra.mxu0 0.0
        %1083 = vmatpush.msra.mxu0 0.0
        %1084 = vmatpush.msra.mxu0 0.0
        %1085 = vmatpush.msra.mxu0 0.0
        %1086 = vmatpush.msra.mxu0 0.0
        %1087 = vmatpush.msra.mxu0 0.0
        %1088 = vmatpush.msra.mxu0 %v177
        %1089 = vmatpush.msra.mxu0 %v176
        %1090 = vmatmul.f32.gmra.mxu0 %v1069
        %v1091 = vpop.f32.mrf.mxu0
        %v1092 = vadd.f32 0.0, %v1091
        %1093 = vmatmul.f32.gmra.mxu0 %v1072
        %v1094 = vpop.f32.mrf.mxu0
        %v1095 = vadd.f32 0.0, %v1094
        %1096 = vdwg.mxu0
        %v1097 = vsel %vm949, 1, 0
        %v1098 = vsel %vm950, 1, 0
        %v1099 = vsel %vm951, 1, 0
        %v1100 = vsel %vm952, 1, 0
        %v1101 = vsel %vm953, 1, 0
        %v1102 = vsel %vm954, 1, 0
        %v1103 = vsel %vm955, 1, 0
        %v1104 = vsel %vm956, 1, 0
        %vm1105 = vcmp.eq.s32.totalorder %v1097, 1
        %vm1106 = vcmp.eq.s32.totalorder %v1098, 1
        %vm1107 = vcmp.eq.s32.totalorder %v1099, 1
        %vm1108 = vcmp.eq.s32.totalorder %v1100, 1
        %vm1109 = vcmp.eq.s32.totalorder %v1101, 1
        %vm1110 = vcmp.eq.s32.totalorder %v1102, 1
        %vm1111 = vcmp.eq.s32.totalorder %v1103, 1
        %vm1112 = vcmp.eq.s32.totalorder %v1104, 1
        %v1113 = vsel %vm1105, %v1005, -inf
        %v1114 = vsel %vm1106, %v1008, -inf
        %v1115 = vsel %vm1107, %v1034, -inf
        %v1116 = vsel %vm1108, %v1037, -inf
        %v1117 = vsel %vm1109, %v1063, -inf
        %v1118 = vsel %vm1110, %v1066, -inf
        %v1119 = vsel %vm1111, %v1092, -inf
        %v1120 = vsel %vm1112, %v1095, -inf
        %v1121 = vmax.f32 %v881, %v1113
        %v1122 = vmax.f32 %v882, %v1114
        %v1123 = vmax.f32 %v883, %v1115
        %v1124 = vmax.f32 %v884, %v1116
        %v1125 = vmax.f32 %v885, %v1117
        %v1126 = vmax.f32 %v886, %v1118
        %v1127 = vmax.f32 %v887, %v1119
        %v1128 = vmax.f32 %v888, %v1120
        %vm1129 = vmor %vm889, %vm949
        %vm1130 = vmor %vm890, %vm950
        %vm1131 = vmor %vm891, %vm951
        %vm1132 = vmor %vm892, %vm952
        %vm1133 = vmor %vm893, %vm953
        %vm1134 = vmor %vm894, %vm954
        %vm1135 = vmor %vm895, %vm955
        %vm1136 = vmor %vm896, %vm956
        %v1137 = vsel %vm1129, 1, 0
        %v1138 = vsel %vm1130, 1, 0
        %v1139 = vsel %vm1131, 1, 0
        %v1140 = vsel %vm1132, 1, 0
        %v1141 = vsel %vm1133, 1, 0
        %v1142 = vsel %vm1134, 1, 0
        %v1143 = vsel %vm1135, 1, 0
        %v1144 = vsel %vm1136, 1, 0
        %v1145 = vcvt.s32.f32 %v1137
        %v1146 = vcvt.s32.f32 %v1138
        %v1147 = vcvt.s32.f32 %v1139
        %v1148 = vcvt.s32.f32 %v1140
        %v1149 = vcvt.s32.f32 %v1141
        %v1150 = vcvt.s32.f32 %v1142
        %v1151 = vcvt.s32.f32 %v1143
        %v1152 = vcvt.s32.f32 %v1144
        %v1153 = vmul.f32 %v1121, %v1145
        %v1154 = vmul.f32 %v1122, %v1146
        %v1155 = vmul.f32 %v1123, %v1147
        %v1156 = vmul.f32 %v1124, %v1148
        %v1157 = vmul.f32 %v1125, %v1149
        %v1158 = vmul.f32 %v1126, %v1150
        %v1159 = vmul.f32 %v1127, %v1151
        %v1160 = vmul.f32 %v1128, %v1152
        %1161 = vst [vmem:[%s155] sm:$0xff] %v1153
        %1162 = vst [vmem:[%s155 + $0x8] sm:$0xff] %v1154
        %1163 = vst [vmem:[%s155 + $0x10] sm:$0xff] %v1155
        %1164 = vst [vmem:[%s155 + $0x18] sm:$0xff] %v1156
        %1165 = vst [vmem:[%s155 + $0x20] sm:$0xff] %v1157
        %1166 = vst [vmem:[%s155 + $0x28] sm:$0xff] %v1158
        %1167 = vst [vmem:[%s155 + $0x30] sm:$0xff] %v1159
        %1168 = vst [vmem:[%s155 + $0x38] sm:$0xff] %v1160
        %s1169 = sand.u32 %s76, 1
        %s1170 = scalar_lea.sflag [#allocation3], %s1169
        %s1171 = sand.u32 %s76, 1
        %s1172 = smul.addr %s1171, 64
        %s1173 = scalar_lea.vmem [#allocation2], %s1172
        // Predicated region
        $region29: #{graph_pool.1} parent=27 // pred_check
          %p1174 = pneg %p86
        $region30: #{graph_pool.1} parent=27 // pred_check_branch
          %1176 = sbr.rel (%p1174) target = $region32
        $region31: #{graph_pool.1} parent=27 // pred_region
          %s1177 = smul.u32 4, %s16
          %1179 = vsyncadd %s1170, 0
          %s1180 = smul.addr %s1177, 2
          %s1181 = smul.addr %s1180, 8
          %s1182 = scalar_lea.hbm %s2, %s1181
          %s1183 = sshll.u32 %s1173, 4
          %s1184 = int_to_ptr.vmem [resolvable:$true] %s1183
          %s1185 = sshll.u32 %s1182, 4
          %s1186 = int_to_ptr.hbm [resolvable:$true] %s1185
          %1191 = dma.vmem_to_hbm [thread:$0]  %s1184, 1024, %s1186, %s1170, 128, 128, 8
        $region32: #{graph_pool.1} parent=27 // pred_fallthru
          _
      $region28: #{graph_pool.1} parent=5 // pred_fallthru
        _
      %p1192 = scmp.le.s32.totalorder 2, %s11
      // Predicated region
      $region33: #{graph_pool.1} parent=5 // pred_check
        %p1193 = pneg %p1192
      $region34: #{graph_pool.1} parent=5 // pred_check_branch
        %1195 = sbr.rel (%p1193) target = $region36
      $region35: #{graph_pool.1} parent=5 // pred_region
        %s1196 = ssub.s32 %s11, 2
        // Predicated region
        $region37: #{graph_pool.1} parent=35 // pred_check
          %p1197 = pneg %p92
        $region38: #{graph_pool.1} parent=35 // pred_check_branch
          %1199 = sbr.rel (%p1197) target = $region40
        $region39: #{graph_pool.1} parent=35 // pred_region
          %s1200 = sand.u32 %s77, 1
          %s1201 = scalar_lea.sflag [#allocation3], %s1200
          %s1202 = sand.u32 %s77, 1
          %s1203 = smul.addr %s1202, 64
          %s1204 = scalar_lea.vmem [#allocation2], %s1203
          %1206 = dma.done %s1201, 1024
        $region40: #{graph_pool.1} parent=35 // pred_fallthru
          _
      $region36: #{graph_pool.1} parent=5 // pred_fallthru
        _
    $region6: #{graph_pool.1} parent=1 // loop_footer
      %s15 = sadd.s32 1, %s11
    $region7: #{graph_pool.1} parent=1 // loop_footer_branch
      %10 = sbr.rel target = $region3
    $region8: #{graph_pool.1} parent=1 // loop_exit
      _
    %1207 = vsyncpa [#allocation3], 1
    %s1208 = scalar_lea.sflag [#allocation3], 1
    %1209 = vsyncpa %s1208, 1

</llo_original>
